<compile_context>
chip_gen: v6e
topology: v6e:2x2x1
jax: 0.10.0
libtpu: 0.0.40
codegen_flags: <defaults>
</compile_context>

<pallas_src>
import functools

import numpy as np
import jax
import jax.numpy as jnp
from jax import lax
from jax.experimental import pallas as pl
from jax.experimental.pallas import tpu as pltpu

UNVOICED_SYMBOL = 0.0  # diffsptk default magic number


def _cdiv(a, b):
    return -(-a // b)


def _rup(a, b):
    return _cdiv(a, b) * b


def _magic_intpl_kernel(x_ref, y_ref, *, magic_number, t_len, needed,
                        strip_rows, num_strips):
    """x_ref/y_ref: (block_r, t_len) tiles; time on the 128-lane axis.

    The block is processed in (strip_rows, t_len) strips so the scan state
    (lv/li/rv/ri + iota) stays vreg-resident across all scan levels.
    """

    def strip_body(i, carry):
        start = i * strip_rows
        if not isinstance(start, int):
            start = pl.multiple_of(start, strip_rows)
        xv = x_ref[pl.ds(start, strip_rows), :]                   # input dtype
        t_idx = lax.broadcasted_iota(jnp.int32, (strip_rows, t_len), 1)
        nonmagic = xv != magic_number

        # Validity encoded in the neighbour index:
        #   li = index of nearest non-magic <= t (or -1),   lv = its value
        #   ri = index of nearest non-magic >= t (or t_len), rv = its value
        # Values carried in the input dtype (copy/select only); cast to f32
        # only at the lerp.
        lv, li = xv, jnp.where(nonmagic, t_idx, -1)
        rv, ri = xv, jnp.where(nonmagic, t_idx, t_len)

        # ---- forward fill (Hillis-Steele; coverage after shifts 1..S = 2S-1)
        s, cover = 1, 0
        while cover < needed:
            sh_v = pltpu.roll(lv, s, 1)
            sh_i = pltpu.roll(li, s, 1)
            # Take only if nothing found yet and the candidate is not a lane
            # wrap (wrapped valid index > t).  Accepting -1 is harmless.
            take = jnp.logical_and(li < 0, sh_i <= t_idx)
            lv = jnp.where(take, sh_v, lv)
            li = jnp.where(take, sh_i, li)
            cover += s
            s *= 2

        # ---- backward fill (left-roll by s == right-roll by t_len - s;
        #      XLU lane rotation cost is independent of the static shift)
        s, cover = 1, 0
        while cover < needed:
            sh_v = pltpu.roll(rv, t_len - s, 1)
            sh_i = pltpu.roll(ri, t_len - s, 1)
            take = jnp.logical_and(ri >= t_len, sh_i >= t_idx)
            rv = jnp.where(take, sh_v, rv)
            ri = jnp.where(take, sh_i, ri)
            cover += s
            s *= 2

        # ---- lerp epilogue (f32).  Non-magic positions take the interp
        # branch with w == 0 exactly (li == ri == t); all-magic rows keep
        # lv == magic, so the final fallback is lv.  No reload of x needed.
        lvalid = li >= 0
        rvalid = ri < t_len
        lvf = lv.astype(jnp.float32)
        rvf = rv.astype(jnp.float32)
        denom = (ri - li).astype(jnp.float32)
        denom = jnp.where(denom == 0.0, 1.0, denom)    # only hit when w == 0
        w = (t_idx - li).astype(jnp.float32) * pl.reciprocal(denom, approx=False)
        interp = lvf + w * (rvf - lvf)
        y = jnp.where(jnp.logical_and(lvalid, rvalid), interp,
                      jnp.where(rvalid, rvf, lvf))
        y_ref[pl.ds(start, strip_rows), :] = y.astype(y_ref.dtype)
        return carry

    if num_strips == 1:
        strip_body(0, 0)
    else:
        lax.fori_loop(0, num_strips, strip_body, 0)


def _interp_rows(rows, magic_number, max_gap=None):
    """rows: (R, T) array, each row an independent time series (time on lanes)."""
    R, T = rows.shape
    T_pad = _rup(T, 128)
    itemsize = jnp.dtype(rows.dtype).itemsize

    # Strip sizing: keep ~5 carried (strip_rows, T_pad) f32-equivalent arrays
    # within ~48 of the 64 vregs so the scan stays register-resident.
    strip_rows = 8
    while strip_rows < 64 and 5 * (strip_rows * 2) * T_pad <= 48 * 1024:
        strip_rows *= 2
    strip_rows = min(strip_rows, max(8, _rup(R, 8)))   # don't over-pad tiny R

    # Row-block sizing from the I/O working set: in + out, double-buffered
    # (4 tiles), kept under ~24 MiB so the 32 MiB scoped-VMEM limit holds on
    # every generation (v7x has only 64 MiB physical VMEM).
    cap = (24 << 20) // (4 * T_pad * itemsize)
    cap = max(strip_rows, (min(2048, cap) // strip_rows) * strip_rows)
    R_s = _rup(R, strip_rows)
    nblocks = _cdiv(R_s, cap)
    if nblocks == 1 and R_s >= 2 * strip_rows:
        nblocks = 2                       # let megacore parts use both TCs
    if nblocks > 1 and nblocks % 2:
        nblocks += 1                      # even block count: 2-TC balance
    nblocks = max(1, min(nblocks, R_s // strip_rows))
    block_r = _rup(_cdiv(R_s, nblocks), strip_rows)
    R_pad = block_r * nblocks

    # Padding time with the magic number is load-bearing: it only extends
    # trailing magic runs, which are hold-filled and then sliced away.
    rows_p = jnp.pad(rows, ((0, R_pad - R), (0, T_pad - T)),
                     constant_values=float(magic_number))

    # Scan coverage: exact mode needs to reach T_pad - 1 lanes away.  With
    # max_gap the caller guarantees every magic run (including leading /
    # trailing runs) is at most max_gap frames long.
    if max_gap is None:
        needed = T_pad - 1
    else:
        needed = max(0, min(int(max_gap), T_pad - 1))

    kernel = functools.partial(
        _magic_intpl_kernel, magic_number=float(magic_number), t_len=T_pad,
        needed=needed, strip_rows=strip_rows, num_strips=block_r // strip_rows)

    out = pl.pallas_call(
        kernel,
        out_shape=jax.ShapeDtypeStruct((R_pad, T_pad), rows.dtype),
        grid=(nblocks,),
        in_specs=[pl.BlockSpec((block_r, T_pad), lambda i: (i, 0))],
        out_specs=pl.BlockSpec((block_r, T_pad), lambda i: (i, 0)),
        compiler_params=pltpu.CompilerParams(
            dimension_semantics=("parallel",),
            vmem_limit_bytes=32 * 1024 * 1024),
    )(rows_p)
    return out[:R, :T]


def magic_number_interpolation(x, magic_number=UNVOICED_SYMBOL, max_gap=None):
    """Equivalent of MagicNumberInterpolation(magic_number)(x).

    x: (B, N, D), (N, D) or (N,)   (time axis = N)
    max_gap: optional cap on the longest magic run, including leading/trailing
             runs (scan-depth optimization); None (default) is exact.
    """
    d = x.ndim
    if d == 1:
        x3 = x.reshape(1, -1, 1)
    elif d == 2:
        x3 = x[None, ...]
    else:
        x3 = x
    B, T, D = x3.shape
    if D == 1:
        # No transpose needed: (B, T, 1) is already contiguous (B, T) rows.
        y_rows = _interp_rows(x3.reshape(B, T), magic_number, max_gap)
        y = y_rows.reshape(B, T, 1)
    else:
        # TODO(synk): for large D, fuse this (B,T,D)->(B*D,T) relayout into
        # the kernel (read a (block_b, T_pad, D) block, transpose in VMEM) to
        # avoid two extra HBM passes on each side.
        rows = jnp.swapaxes(x3, 1, 2).reshape(B * D, T)     # (B*D, T)
        y_rows = _interp_rows(rows, magic_number, max_gap)
        y = y_rows.reshape(B, D, T).swapaxes(1, 2)          # (B, T, D)
    if d == 1:
        y = y.reshape(-1)
    elif d == 2:
        y = y[0]
    return y


def _reference(x3, magic):
    """Pure-numpy reference for a (B, N, D) array."""
    x3 = np.asarray(x3, dtype=np.float64)
    out = x3.copy()
    B, T, D = x3.shape
    for b in range(B):
        for d_ in range(D):
            row = x3[b, :, d_]
            nz = np.where(row != magic)[0]
            for t in range(T):
                if row[t] == magic:
                    left = nz[nz < t]
                    right = nz[nz > t]
                    if left.size and right.size:
                        l, r = left[-1], right[0]
                        w = (t - l) / (r - l)
                        out[b, t, d_] = row[l] + w * (row[r] - row[l])
                    elif right.size:
                        out[b, t, d_] = row[right[0]]
                    elif left.size:
                        out[b, t, d_] = row[left[-1]]
    return out


if __name__ == "__main__":
    magic = 0.0

    # 1-D doc example: [0, 1, 2, 0, 4, 0] -> [1, 1, 2, 3, 4, 4]
    x1 = jnp.array([0.0, 1.0, 2.0, 0.0, 4.0, 0.0], dtype=jnp.float32)
    y1 = jax.block_until_ready(magic_number_interpolation(x1, magic))
    np.testing.assert_allclose(np.asarray(y1), [1.0, 1.0, 2.0, 3.0, 4.0, 4.0],
                               rtol=1e-5, atol=1e-5)

    # 2-D case with leading/trailing runs and an all-magic feature column.
    x2 = jnp.array([[0.0, 0.0],
                    [1.0, 0.0],
                    [0.0, 0.0],
                    [0.0, 0.0],
                    [5.0, 0.0],
                    [0.0, 0.0]], dtype=jnp.float32)        # (N=6, D=2)
    y2 = jax.block_until_ready(magic_number_interpolation(x2, magic))
    y2_ref = _reference(np.asarray(x2)[None], magic)[0]
    np.testing.assert_allclose(np.asarray(y2), y2_ref, rtol=1e-5, atol=1e-5)

    # 3-D case: B=2, N=16 (time), D=4 (features)
    key = jax.random.PRNGKey(0)
    k_val, k_mask = jax.random.split(key)
    vals = jax.random.normal(k_val, (2, 16, 4), dtype=jnp.float32) + 3.0
    mask = jax.random.bernoulli(k_mask, 0.35, (2, 16, 4))
    x = jnp.where(mask, jnp.float32(magic), vals)

    y = jax.block_until_ready(magic_number_interpolation(x, magic))
    y_ref = _reference(np.asarray(x), magic)
    np.testing.assert_allclose(np.asarray(y), y_ref, rtol=1e-5, atol=1e-5)

    print("KERNEL_OK")
</pallas_src>

<mosaic_0001>
module attributes {stable_mosaic.version = 11 : i64} {
  func.func @_magic_intpl_kernel(%arg0: i32, %arg1: memref<8x128xf32, #tpu.memory_space<vmem>>, %arg2: memref<8x128xf32, #tpu.memory_space<vmem>>) attributes {dimension_semantics = [#tpu.dimension_semantics<parallel>], iteration_bounds = array<i64: 1>, scalar_prefetch = 0 : i64, scratch_operands = 0 : i64, tpu.core_type = #tpu.core_type<tc>, window_params = [{transform_indices = @transform_0, window_bounds = array<i64: 8, 128>}, {transform_indices = @transform_1, window_bounds = array<i64: 8, 128>}]} {
    %c0 = arith.constant 0 : index
    %c0_0 = arith.constant 0 : index
    %0 = vector.load %arg1[%c0, %c0_0] : memref<8x128xf32, #tpu.memory_space<vmem>>, vector<8x128xf32>
    %1 = tpu.iota {dimensions = array<i32: 1>} : vector<8x128xi32>
    %cst = arith.constant 0.000000e+00 : f32
    %2 = vector.broadcast %cst : f32 to vector<8x128xf32>
    %3 = arith.cmpf one, %0, %2 : vector<8x128xf32>
    %c-1_i32 = arith.constant -1 : i32
    %4 = vector.broadcast %c-1_i32 : i32 to vector<8x128xi32>
    %5 = arith.select %3, %1, %4 : vector<8x128xi1>, vector<8x128xi32>
    %c128_i32 = arith.constant 128 : i32
    %6 = vector.broadcast %c128_i32 : i32 to vector<8x128xi32>
    %7 = arith.select %3, %1, %6 : vector<8x128xi1>, vector<8x128xi32>
    %c1_i32 = arith.constant 1 : i32
    %8 = tpu.dynamic_rotate %0 by %c1_i32 dim 1 : vector<8x128xf32>, i32 -> vector<8x128xf32>
    %c1_i32_1 = arith.constant 1 : i32
    %9 = tpu.dynamic_rotate %5 by %c1_i32_1 dim 1 : vector<8x128xi32>, i32 -> vector<8x128xi32>
    %c0_i32 = arith.constant 0 : i32
    %10 = vector.broadcast %c0_i32 : i32 to vector<8x128xi32>
    %11 = arith.cmpi slt, %5, %10 : vector<8x128xi32>
    %12 = arith.cmpi sle, %9, %1 : vector<8x128xi32>
    %13 = arith.andi %11, %12 : vector<8x128xi1>
    %14 = arith.select %13, %8, %0 : vector<8x128xi1>, vector<8x128xf32>
    %15 = arith.select %13, %9, %5 : vector<8x128xi1>, vector<8x128xi32>
    %c2_i32 = arith.constant 2 : i32
    %16 = tpu.dynamic_rotate %14 by %c2_i32 dim 1 : vector<8x128xf32>, i32 -> vector<8x128xf32>
    %c2_i32_2 = arith.constant 2 : i32
    %17 = tpu.dynamic_rotate %15 by %c2_i32_2 dim 1 : vector<8x128xi32>, i32 -> vector<8x128xi32>
    %c0_i32_3 = arith.constant 0 : i32
    %18 = vector.broadcast %c0_i32_3 : i32 to vector<8x128xi32>
    %19 = arith.cmpi slt, %15, %18 : vector<8x128xi32>
    %20 = arith.cmpi sle, %17, %1 : vector<8x128xi32>
    %21 = arith.andi %19, %20 : vector<8x128xi1>
    %22 = arith.select %21, %16, %14 : vector<8x128xi1>, vector<8x128xf32>
    %23 = arith.select %21, %17, %15 : vector<8x128xi1>, vector<8x128xi32>
    %c4_i32 = arith.constant 4 : i32
    %24 = tpu.dynamic_rotate %22 by %c4_i32 dim 1 : vector<8x128xf32>, i32 -> vector<8x128xf32>
    %c4_i32_4 = arith.constant 4 : i32
    %25 = tpu.dynamic_rotate %23 by %c4_i32_4 dim 1 : vector<8x128xi32>, i32 -> vector<8x128xi32>
    %c0_i32_5 = arith.constant 0 : i32
    %26 = vector.broadcast %c0_i32_5 : i32 to vector<8x128xi32>
    %27 = arith.cmpi slt, %23, %26 : vector<8x128xi32>
    %28 = arith.cmpi sle, %25, %1 : vector<8x128xi32>
    %29 = arith.andi %27, %28 : vector<8x128xi1>
    %30 = arith.select %29, %24, %22 : vector<8x128xi1>, vector<8x128xf32>
    %31 = arith.select %29, %25, %23 : vector<8x128xi1>, vector<8x128xi32>
    %c8_i32 = arith.constant 8 : i32
    %32 = tpu.dynamic_rotate %30 by %c8_i32 dim 1 : vector<8x128xf32>, i32 -> vector<8x128xf32>
    %c8_i32_6 = arith.constant 8 : i32
    %33 = tpu.dynamic_rotate %31 by %c8_i32_6 dim 1 : vector<8x128xi32>, i32 -> vector<8x128xi32>
    %c0_i32_7 = arith.constant 0 : i32
    %34 = vector.broadcast %c0_i32_7 : i32 to vector<8x128xi32>
    %35 = arith.cmpi slt, %31, %34 : vector<8x128xi32>
    %36 = arith.cmpi sle, %33, %1 : vector<8x128xi32>
    %37 = arith.andi %35, %36 : vector<8x128xi1>
    %38 = arith.select %37, %32, %30 : vector<8x128xi1>, vector<8x128xf32>
    %39 = arith.select %37, %33, %31 : vector<8x128xi1>, vector<8x128xi32>
    %c16_i32 = arith.constant 16 : i32
    %40 = tpu.dynamic_rotate %38 by %c16_i32 dim 1 : vector<8x128xf32>, i32 -> vector<8x128xf32>
    %c16_i32_8 = arith.constant 16 : i32
    %41 = tpu.dynamic_rotate %39 by %c16_i32_8 dim 1 : vector<8x128xi32>, i32 -> vector<8x128xi32>
    %c0_i32_9 = arith.constant 0 : i32
    %42 = vector.broadcast %c0_i32_9 : i32 to vector<8x128xi32>
    %43 = arith.cmpi slt, %39, %42 : vector<8x128xi32>
    %44 = arith.cmpi sle, %41, %1 : vector<8x128xi32>
    %45 = arith.andi %43, %44 : vector<8x128xi1>
    %46 = arith.select %45, %40, %38 : vector<8x128xi1>, vector<8x128xf32>
    %47 = arith.select %45, %41, %39 : vector<8x128xi1>, vector<8x128xi32>
    %c32_i32 = arith.constant 32 : i32
    %48 = tpu.dynamic_rotate %46 by %c32_i32 dim 1 : vector<8x128xf32>, i32 -> vector<8x128xf32>
    %c32_i32_10 = arith.constant 32 : i32
    %49 = tpu.dynamic_rotate %47 by %c32_i32_10 dim 1 : vector<8x128xi32>, i32 -> vector<8x128xi32>
    %c0_i32_11 = arith.constant 0 : i32
    %50 = vector.broadcast %c0_i32_11 : i32 to vector<8x128xi32>
    %51 = arith.cmpi slt, %47, %50 : vector<8x128xi32>
    %52 = arith.cmpi sle, %49, %1 : vector<8x128xi32>
    %53 = arith.andi %51, %52 : vector<8x128xi1>
    %54 = arith.select %53, %48, %46 : vector<8x128xi1>, vector<8x128xf32>
    %55 = arith.select %53, %49, %47 : vector<8x128xi1>, vector<8x128xi32>
    %c64_i32 = arith.constant 64 : i32
    %56 = tpu.dynamic_rotate %54 by %c64_i32 dim 1 : vector<8x128xf32>, i32 -> vector<8x128xf32>
    %c64_i32_12 = arith.constant 64 : i32
    %57 = tpu.dynamic_rotate %55 by %c64_i32_12 dim 1 : vector<8x128xi32>, i32 -> vector<8x128xi32>
    %c0_i32_13 = arith.constant 0 : i32
    %58 = vector.broadcast %c0_i32_13 : i32 to vector<8x128xi32>
    %59 = arith.cmpi slt, %55, %58 : vector<8x128xi32>
    %60 = arith.cmpi sle, %57, %1 : vector<8x128xi32>
    %61 = arith.andi %59, %60 : vector<8x128xi1>
    %62 = arith.select %61, %56, %54 : vector<8x128xi1>, vector<8x128xf32>
    %63 = arith.select %61, %57, %55 : vector<8x128xi1>, vector<8x128xi32>
    %c127_i32 = arith.constant 127 : i32
    %64 = tpu.dynamic_rotate %0 by %c127_i32 dim 1 : vector<8x128xf32>, i32 -> vector<8x128xf32>
    %c127_i32_14 = arith.constant 127 : i32
    %65 = tpu.dynamic_rotate %7 by %c127_i32_14 dim 1 : vector<8x128xi32>, i32 -> vector<8x128xi32>
    %c128_i32_15 = arith.constant 128 : i32
    %66 = vector.broadcast %c128_i32_15 : i32 to vector<8x128xi32>
    %67 = arith.cmpi sge, %7, %66 : vector<8x128xi32>
    %68 = arith.cmpi sge, %65, %1 : vector<8x128xi32>
    %69 = arith.andi %67, %68 : vector<8x128xi1>
    %70 = arith.select %69, %64, %0 : vector<8x128xi1>, vector<8x128xf32>
    %71 = arith.select %69, %65, %7 : vector<8x128xi1>, vector<8x128xi32>
    %c126_i32 = arith.constant 126 : i32
    %72 = tpu.dynamic_rotate %70 by %c126_i32 dim 1 : vector<8x128xf32>, i32 -> vector<8x128xf32>
    %c126_i32_16 = arith.constant 126 : i32
    %73 = tpu.dynamic_rotate %71 by %c126_i32_16 dim 1 : vector<8x128xi32>, i32 -> vector<8x128xi32>
    %c128_i32_17 = arith.constant 128 : i32
    %74 = vector.broadcast %c128_i32_17 : i32 to vector<8x128xi32>
    %75 = arith.cmpi sge, %71, %74 : vector<8x128xi32>
    %76 = arith.cmpi sge, %73, %1 : vector<8x128xi32>
    %77 = arith.andi %75, %76 : vector<8x128xi1>
    %78 = arith.select %77, %72, %70 : vector<8x128xi1>, vector<8x128xf32>
    %79 = arith.select %77, %73, %71 : vector<8x128xi1>, vector<8x128xi32>
    %c124_i32 = arith.constant 124 : i32
    %80 = tpu.dynamic_rotate %78 by %c124_i32 dim 1 : vector<8x128xf32>, i32 -> vector<8x128xf32>
    %c124_i32_18 = arith.constant 124 : i32
    %81 = tpu.dynamic_rotate %79 by %c124_i32_18 dim 1 : vector<8x128xi32>, i32 -> vector<8x128xi32>
    %c128_i32_19 = arith.constant 128 : i32
    %82 = vector.broadcast %c128_i32_19 : i32 to vector<8x128xi32>
    %83 = arith.cmpi sge, %79, %82 : vector<8x128xi32>
    %84 = arith.cmpi sge, %81, %1 : vector<8x128xi32>
    %85 = arith.andi %83, %84 : vector<8x128xi1>
    %86 = arith.select %85, %80, %78 : vector<8x128xi1>, vector<8x128xf32>
    %87 = arith.select %85, %81, %79 : vector<8x128xi1>, vector<8x128xi32>
    %c120_i32 = arith.constant 120 : i32
    %88 = tpu.dynamic_rotate %86 by %c120_i32 dim 1 : vector<8x128xf32>, i32 -> vector<8x128xf32>
    %c120_i32_20 = arith.constant 120 : i32
    %89 = tpu.dynamic_rotate %87 by %c120_i32_20 dim 1 : vector<8x128xi32>, i32 -> vector<8x128xi32>
    %c128_i32_21 = arith.constant 128 : i32
    %90 = vector.broadcast %c128_i32_21 : i32 to vector<8x128xi32>
    %91 = arith.cmpi sge, %87, %90 : vector<8x128xi32>
    %92 = arith.cmpi sge, %89, %1 : vector<8x128xi32>
    %93 = arith.andi %91, %92 : vector<8x128xi1>
    %94 = arith.select %93, %88, %86 : vector<8x128xi1>, vector<8x128xf32>
    %95 = arith.select %93, %89, %87 : vector<8x128xi1>, vector<8x128xi32>
    %c112_i32 = arith.constant 112 : i32
    %96 = tpu.dynamic_rotate %94 by %c112_i32 dim 1 : vector<8x128xf32>, i32 -> vector<8x128xf32>
    %c112_i32_22 = arith.constant 112 : i32
    %97 = tpu.dynamic_rotate %95 by %c112_i32_22 dim 1 : vector<8x128xi32>, i32 -> vector<8x128xi32>
    %c128_i32_23 = arith.constant 128 : i32
    %98 = vector.broadcast %c128_i32_23 : i32 to vector<8x128xi32>
    %99 = arith.cmpi sge, %95, %98 : vector<8x128xi32>
    %100 = arith.cmpi sge, %97, %1 : vector<8x128xi32>
    %101 = arith.andi %99, %100 : vector<8x128xi1>
    %102 = arith.select %101, %96, %94 : vector<8x128xi1>, vector<8x128xf32>
    %103 = arith.select %101, %97, %95 : vector<8x128xi1>, vector<8x128xi32>
    %c96_i32 = arith.constant 96 : i32
    %104 = tpu.dynamic_rotate %102 by %c96_i32 dim 1 : vector<8x128xf32>, i32 -> vector<8x128xf32>
    %c96_i32_24 = arith.constant 96 : i32
    %105 = tpu.dynamic_rotate %103 by %c96_i32_24 dim 1 : vector<8x128xi32>, i32 -> vector<8x128xi32>
    %c128_i32_25 = arith.constant 128 : i32
    %106 = vector.broadcast %c128_i32_25 : i32 to vector<8x128xi32>
    %107 = arith.cmpi sge, %103, %106 : vector<8x128xi32>
    %108 = arith.cmpi sge, %105, %1 : vector<8x128xi32>
    %109 = arith.andi %107, %108 : vector<8x128xi1>
    %110 = arith.select %109, %104, %102 : vector<8x128xi1>, vector<8x128xf32>
    %111 = arith.select %109, %105, %103 : vector<8x128xi1>, vector<8x128xi32>
    %c64_i32_26 = arith.constant 64 : i32
    %112 = tpu.dynamic_rotate %110 by %c64_i32_26 dim 1 : vector<8x128xf32>, i32 -> vector<8x128xf32>
    %c64_i32_27 = arith.constant 64 : i32
    %113 = tpu.dynamic_rotate %111 by %c64_i32_27 dim 1 : vector<8x128xi32>, i32 -> vector<8x128xi32>
    %c128_i32_28 = arith.constant 128 : i32
    %114 = vector.broadcast %c128_i32_28 : i32 to vector<8x128xi32>
    %115 = arith.cmpi sge, %111, %114 : vector<8x128xi32>
    %116 = arith.cmpi sge, %113, %1 : vector<8x128xi32>
    %117 = arith.andi %115, %116 : vector<8x128xi1>
    %118 = arith.select %117, %112, %110 : vector<8x128xi1>, vector<8x128xf32>
    %119 = arith.select %117, %113, %111 : vector<8x128xi1>, vector<8x128xi32>
    %c0_i32_29 = arith.constant 0 : i32
    %120 = vector.broadcast %c0_i32_29 : i32 to vector<8x128xi32>
    %121 = arith.cmpi sge, %63, %120 : vector<8x128xi32>
    %c128_i32_30 = arith.constant 128 : i32
    %122 = vector.broadcast %c128_i32_30 : i32 to vector<8x128xi32>
    %123 = arith.cmpi slt, %119, %122 : vector<8x128xi32>
    %124 = arith.subi %119, %63 : vector<8x128xi32>
    %125 = arith.sitofp %124 : vector<8x128xi32> to vector<8x128xf32>
    %cst_31 = arith.constant 0.000000e+00 : f32
    %126 = vector.broadcast %cst_31 : f32 to vector<8x128xf32>
    %127 = arith.cmpf oeq, %125, %126 : vector<8x128xf32>
    %cst_32 = arith.constant 1.000000e+00 : f32
    %128 = vector.broadcast %cst_32 : f32 to vector<8x128xf32>
    %129 = arith.select %127, %128, %125 : vector<8x128xi1>, vector<8x128xf32>
    %130 = arith.subi %1, %63 : vector<8x128xi32>
    %131 = arith.sitofp %130 : vector<8x128xi32> to vector<8x128xf32>
    %132 = tpu.reciprocal %129 : vector<8x128xf32> -> vector<8x128xf32>
    %133 = arith.mulf %131, %132 : vector<8x128xf32>
    %134 = arith.subf %118, %62 : vector<8x128xf32>
    %135 = arith.mulf %133, %134 : vector<8x128xf32>
    %136 = arith.addf %62, %135 : vector<8x128xf32>
    %137 = arith.andi %121, %123 : vector<8x128xi1>
    %138 = arith.select %123, %118, %62 : vector<8x128xi1>, vector<8x128xf32>
    %139 = arith.select %137, %136, %138 : vector<8x128xi1>, vector<8x128xf32>
    %c0_33 = arith.constant 0 : index
    %c0_34 = arith.constant 0 : index
    %140 = vector.load %arg2[%c0_33, %c0_34] : memref<8x128xf32, #tpu.memory_space<vmem>>, vector<8x128xf32>
    tpu.vector_store %arg2[%c0_33, %c0_34], %139 {strides = array<i32>} : memref<8x128xf32, #tpu.memory_space<vmem>>, vector<8x128xf32>,
    return
  }
  func.func @transform_0(%arg0: i32) -> (i32, i32) {
    %c0_i32 = arith.constant 0 : i32
    %c0_i32_0 = arith.constant 0 : i32
    return %arg0, %c0_i32 : i32, i32
  }
  func.func @transform_1(%arg0: i32) -> (i32, i32) {
    %c0_i32 = arith.constant 0 : i32
    %c0_i32_0 = arith.constant 0 : i32
    return %arg0, %c0_i32 : i32, i32
  }
}

</mosaic_0001>

<llo_original>
// kernel: tpu_custom_call.1
$region0: #{tpu_custom_call.1}
  #allocation0 [shape = 'u32[]', space=smem, size = 0x4, offset = 0x4, fixed_abs, tag = 'smem constant byte address 0x4 - core index']
  #allocation1 [shape = 'u32[144,128]{1,0:T(1,128)}', space=vmem, size = 0x12000, scoped, tag = 'internal scratch']
  %s0 = inlined_call_operand.hbm [shape: f32[8,128], index: 0, kind: input, shape index: {}]
  %s1 = inlined_call_operand.hbm [shape: f32[8,128], index: 1, kind: output, shape index: {}]
  %s2 = sld [smem:[#allocation0]]
  $region18: #{tpu_custom_call.1} parent=0
    _
  %s4 = ssub.s32 1, %s2
  %s5 = scalar_select 0, %s4, %s2
  $region1: #{tpu_custom_call.1} parent=0
    #allocation2 [shape = 'u8[4096]{0}', space=vmem, size = 0x1000, scoped, tag = 'input window, operand 0, single buffered']
    #allocation3 [shape = 's32[1]{0}', space=sflag, size = 0x4, scoped, tag = 'scoped memory for tpu_custom_call.1']
    #allocation4 [shape = 's32[1]{0}', space=sflag, size = 0x4, scoped, tag = 'scoped memory for tpu_custom_call.1']
    #allocation5 [shape = 'u8[4096]{0}', space=vmem, size = 0x1000, scoped, tag = 'output window, operand 0, single buffered']
    %6 = vsyncpa [#allocation3], 0
    %7 = vsyncpa [#allocation4], 0
    // Predicated region
    $region2: #{tpu_custom_call.1} parent=1 // pred_check
      _
    $region3: #{tpu_custom_call.1} parent=1 // pred_check_branch
      %9 = sbr.rel (0) target = $region5
    $region4: #{tpu_custom_call.1} parent=1 // pred_region
      %s11 = ssub.s32 128, 128
      %12 = vsyncadd [#allocation3], %s11
      %s14 = sshll.u32 [#allocation2], 4
      %s15 = int_to_ptr.vmem [resolvable:$true] %s14
      %17 = dma.hbm_to_vmem [thread:$0]  %s0, 128, %s15, [#allocation3]
    $region5: #{tpu_custom_call.1} parent=1 // pred_fallthru
      _
    // Predicated region
    $region6: #{tpu_custom_call.1} parent=1 // pred_check
      _
    $region7: #{tpu_custom_call.1} parent=1 // pred_check_branch
      %19 = sbr.rel (0) target = $region9
    $region8: #{tpu_custom_call.1} parent=1 // pred_region
      %20 = dma.done [#allocation3], 128
    $region9: #{tpu_custom_call.1} parent=1 // pred_fallthru
      _
    %v21 = vld [vmem:[#allocation2] sm:$0xff]
    %v22 = vlaneseq
    %v23 = vand.u32 %v22, 127
    %vm24 = vcmp.ne.f32.partialorder %v21, 0.0
    %v25 = vsel %vm24, %v23, 4294967295
    %v26 = vsel %vm24, %v23, 128
    %27 = vrot.lane.b32.xlu0 %v21, 1
    %v28 = vpop.permute.xlu0 %27
    %29 = vrot.lane.b32.xlu0 %v25, 1
    %v30 = vpop.permute.xlu0 %29
    %vm31 = vcmp.lt.s32.totalorder %v25, 0
    %vm32 = vcmp.le.s32.totalorder %v30, %v23
    %vm33 = vmand %vm31, %vm32
    %v34 = vsel %vm33, %v28, %v21
    %v35 = vsel %vm33, %v30, %v25
    %36 = vrot.lane.b32.xlu0 %v34, 2
    %v37 = vpop.permute.xlu0 %36
    %38 = vrot.lane.b32.xlu0 %v35, 2
    %v39 = vpop.permute.xlu0 %38
    %vm40 = vcmp.lt.s32.totalorder %v35, 0
    %vm41 = vcmp.le.s32.totalorder %v39, %v23
    %vm42 = vmand %vm40, %vm41
    %v43 = vsel %vm42, %v37, %v34
    %v44 = vsel %vm42, %v39, %v35
    %45 = vrot.lane.b32.xlu0 %v43, 4
    %v46 = vpop.permute.xlu0 %45
    %47 = vrot.lane.b32.xlu0 %v44, 4
    %v48 = vpop.permute.xlu0 %47
    %vm49 = vcmp.lt.s32.totalorder %v44, 0
    %vm50 = vcmp.le.s32.totalorder %v48, %v23
    %vm51 = vmand %vm49, %vm50
    %v52 = vsel %vm51, %v46, %v43
    %v53 = vsel %vm51, %v48, %v44
    %54 = vrot.lane.b32.xlu0 %v52, 8
    %v55 = vpop.permute.xlu0 %54
    %56 = vrot.lane.b32.xlu0 %v53, 8
    %v57 = vpop.permute.xlu0 %56
    %vm58 = vcmp.lt.s32.totalorder %v53, 0
    %vm59 = vcmp.le.s32.totalorder %v57, %v23
    %vm60 = vmand %vm58, %vm59
    %v61 = vsel %vm60, %v55, %v52
    %v62 = vsel %vm60, %v57, %v53
    %63 = vrot.lane.b32.xlu0 %v61, 16
    %v64 = vpop.permute.xlu0 %63
    %65 = vrot.lane.b32.xlu0 %v62, 16
    %v66 = vpop.permute.xlu0 %65
    %vm67 = vcmp.lt.s32.totalorder %v62, 0
    %vm68 = vcmp.le.s32.totalorder %v66, %v23
    %vm69 = vmand %vm67, %vm68
    %v70 = vsel %vm69, %v64, %v61
    %v71 = vsel %vm69, %v66, %v62
    %72 = vrot.lane.b32.xlu0 %v70, 32
    %v73 = vpop.permute.xlu0 %72
    %74 = vrot.lane.b32.xlu0 %v71, 32
    %v75 = vpop.permute.xlu0 %74
    %vm76 = vcmp.lt.s32.totalorder %v71, 0
    %vm77 = vcmp.le.s32.totalorder %v75, %v23
    %vm78 = vmand %vm76, %vm77
    %v79 = vsel %vm78, %v73, %v70
    %v80 = vsel %vm78, %v75, %v71
    %81 = vrot.lane.b32.xlu0 %v79, 64
    %v82 = vpop.permute.xlu0 %81
    %83 = vrot.lane.b32.xlu0 %v80, 64
    %v84 = vpop.permute.xlu0 %83
    %vm85 = vcmp.lt.s32.totalorder %v80, 0
    %vm86 = vcmp.le.s32.totalorder %v84, %v23
    %vm87 = vmand %vm85, %vm86
    %v88 = vsel %vm87, %v82, %v79
    %v89 = vsel %vm87, %v84, %v80
    %90 = vrot.lane.b32.xlu0 %v21, 127
    %v91 = vpop.permute.xlu0 %90
    %92 = vrot.lane.b32.xlu0 %v26, 127
    %v93 = vpop.permute.xlu0 %92
    %vm94 = vcmp.ge.s32.totalorder %v26, 128
    %vm95 = vcmp.ge.s32.totalorder %v93, %v23
    %vm96 = vmand %vm94, %vm95
    %v97 = vsel %vm96, %v91, %v21
    %v98 = vsel %vm96, %v93, %v26
    %99 = vrot.lane.b32.xlu0 %v97, 126
    %v100 = vpop.permute.xlu0 %99
    %101 = vrot.lane.b32.xlu0 %v98, 126
    %v102 = vpop.permute.xlu0 %101
    %vm103 = vcmp.ge.s32.totalorder %v98, 128
    %vm104 = vcmp.ge.s32.totalorder %v102, %v23
    %vm105 = vmand %vm103, %vm104
    %v106 = vsel %vm105, %v100, %v97
    %v107 = vsel %vm105, %v102, %v98
    %108 = vrot.lane.b32.xlu0 %v106, 124
    %v109 = vpop.permute.xlu0 %108
    %110 = vrot.lane.b32.xlu0 %v107, 124
    %v111 = vpop.permute.xlu0 %110
    %vm112 = vcmp.ge.s32.totalorder %v107, 128
    %vm113 = vcmp.ge.s32.totalorder %v111, %v23
    %vm114 = vmand %vm112, %vm113
    %v115 = vsel %vm114, %v109, %v106
    %v116 = vsel %vm114, %v111, %v107
    %117 = vrot.lane.b32.xlu0 %v115, 120
    %v118 = vpop.permute.xlu0 %117
    %119 = vrot.lane.b32.xlu0 %v116, 120
    %v120 = vpop.permute.xlu0 %119
    %vm121 = vcmp.ge.s32.totalorder %v116, 128
    %vm122 = vcmp.ge.s32.totalorder %v120, %v23
    %vm123 = vmand %vm121, %vm122
    %v124 = vsel %vm123, %v118, %v115
    %v125 = vsel %vm123, %v120, %v116
    %126 = vrot.lane.b32.xlu0 %v124, 112
    %v127 = vpop.permute.xlu0 %126
    %128 = vrot.lane.b32.xlu0 %v125, 112
    %v129 = vpop.permute.xlu0 %128
    %vm130 = vcmp.ge.s32.totalorder %v125, 128
    %vm131 = vcmp.ge.s32.totalorder %v129, %v23
    %vm132 = vmand %vm130, %vm131
    %v133 = vsel %vm132, %v127, %v124
    %v134 = vsel %vm132, %v129, %v125
    %135 = vrot.lane.b32.xlu0 %v133, 96
    %v136 = vpop.permute.xlu0 %135
    %137 = vrot.lane.b32.xlu0 %v134, 96
    %v138 = vpop.permute.xlu0 %137
    %vm139 = vcmp.ge.s32.totalorder %v134, 128
    %vm140 = vcmp.ge.s32.totalorder %v138, %v23
    %vm141 = vmand %vm139, %vm140
    %v142 = vsel %vm141, %v136, %v133
    %v143 = vsel %vm141, %v138, %v134
    %144 = vrot.lane.b32.xlu0 %v142, 64
    %v145 = vpop.permute.xlu0 %144
    %146 = vrot.lane.b32.xlu0 %v143, 64
    %v147 = vpop.permute.xlu0 %146
    %vm148 = vcmp.ge.s32.totalorder %v143, 128
    %vm149 = vcmp.ge.s32.totalorder %v147, %v23
    %vm150 = vmand %vm148, %vm149
    %v151 = vsel %vm150, %v145, %v142
    %v152 = vsel %vm150, %v147, %v143
    %vm153 = vcmp.ge.s32.totalorder %v89, 0
    %vm154 = vcmp.lt.s32.totalorder %v152, 128
    %v155 = vsub.s32 %v152, %v89
    %v156 = vcvt.s32.f32 %v155
    %vm157 = vcmp.eq.f32.partialorder %v156, 0.0
    %v158 = vsel %vm157, 1.0, %v156
    %v159 = vsub.s32 %v23, %v89
    %v160 = vcvt.s32.f32 %v159
    %v161 = vrcp.pop %v158
    %v162 = vmul.f32 %v160, %v161
    %v163 = vsub.f32 %v151, %v88
    %v164 = vmul.f32 %v162, %v163
    %v165 = vadd.f32 %v88, %v164
    %vm166 = vmand %vm153, %vm154
    %v167 = vsel %vm154, %v151, %v88
    %v168 = vsel %vm166, %v165, %v167
    %169 = vst [vmem:[#allocation5] sm:$0xff] %v168
    // Predicated region
    $region10: #{tpu_custom_call.1} parent=1 // pred_check
      _
    $region11: #{tpu_custom_call.1} parent=1 // pred_check_branch
      %171 = sbr.rel (0) target = $region13
    $region12: #{tpu_custom_call.1} parent=1 // pred_region
      %s173 = ssub.s32 128, 128
      %174 = vsyncadd [#allocation4], %s173
      %s176 = sshll.u32 [#allocation5], 4
      %s177 = int_to_ptr.vmem [resolvable:$true] %s176
      %179 = dma.vmem_to_hbm [thread:$0]  %s177, 128, %s1, [#allocation4]
    $region13: #{tpu_custom_call.1} parent=1 // pred_fallthru
      _
    // Predicated region
    $region14: #{tpu_custom_call.1} parent=1 // pred_check
      _
    $region15: #{tpu_custom_call.1} parent=1 // pred_check_branch
      %181 = sbr.rel (0) target = $region17
    $region16: #{tpu_custom_call.1} parent=1 // pred_region
      %182 = dma.done [#allocation4], 128
    $region17: #{tpu_custom_call.1} parent=1 // pred_fallthru
      _
    %183 = vsyncpa [#allocation3], 1
    %184 = vsyncpa [#allocation4], 1

</llo_original>
